<compile_context>
chip_gen: v7x
topology: tpu7x:2x2x1
jax: 0.10.0
libtpu: 0.0.40
codegen_flags: <defaults>
</compile_context>

<pallas_src>
import functools

import jax
import jax.numpy as jnp
from jax.experimental import pallas as pl
from jax.experimental.pallas import tpu as pltpu


def _outconv_kernel(x_ref, w_ref, b_ref, o_ref):
    # x_ref: (B, Cin, R, L) VMEM    w_ref: (Cout, Cin) SMEM    b_ref: (Cout,) SMEM
    # o_ref: (B, Cout, R, L) VMEM
    cin = x_ref.shape[1]
    cout = o_ref.shape[1]
    for oc in range(cout):                      # fully unrolled: Cout*Cin slab FMAs (VPU)
        acc = x_ref[:, 0, :, :].astype(jnp.float32) * w_ref[oc, 0]
        for ic in range(1, cin):
            acc = acc + x_ref[:, ic, :, :].astype(jnp.float32) * w_ref[oc, ic]
        # Direct per-channel store: unmasked lane-dense vst, no concatenate.
        o_ref[:, oc, :, :] = (acc + b_ref[oc]).astype(o_ref.dtype)


def _round_up(a, m):
    return (a + m - 1) // m * m


def _plan_tiles(n, cin, cout, hw, itemsize, target_bytes):
    """Choose (lane_w, hw_pad, rows, rows_tile, b_tile).

    The (possibly padded) spatial axis is viewed as (rows, lane_w); blocks
    cover the full lane dim (contiguous DMA) and rows_tile rows (a multiple of
    8, or the full extent), sized so in+out traffic per step is ~target_bytes.
    """
    # Lane width: a multiple of 128.  Prefer one that divides H*W exactly
    # (zero padding); otherwise pad H*W up to the next multiple.
    lane_w = None
    if hw % 128 == 0:
        for cand in (1024, 896, 768, 640, 512, 384, 256, 128):
            if hw % cand == 0:
                lane_w = cand
                break
    if lane_w is None:
        lane_w = min(1024, _round_up(max(hw, 1), 128))
    hw_pad = _round_up(hw, lane_w)
    rows = hw_pad // lane_w

    # Rows per step: in+out bytes per (image, row); double-buffered residency
    # stays ~2x target (well inside v5e's 16 MiB default scoped VMEM).  No
    # sublane-padding fudge factor needed: channels are no longer sublanes.
    bytes_per_row = lane_w * (cin + cout) * itemsize
    rows_budget = max(8, target_bytes // bytes_per_row)
    if rows <= rows_budget:
        rows_tile = rows                        # full extent (always a legal block dim)
    else:
        rows_tile = max(8, (rows_budget // 8) * 8)   # multiple of 8; ragged last block OK

    # Small images: put several batch images in one step to amortize the
    # ~0.35 us/step pipeline overhead.
    b_tile = 1
    if rows_tile == rows:
        per_image_bytes = max(1, rows * bytes_per_row)
        want = int(min(n, max(1, target_bytes // per_image_bytes)))
        for cand in range(want, 0, -1):
            if n % cand == 0:                   # keep the batch grid exact
                b_tile = cand
                break

    # Megacore (v7x) load balance: prefer >= 8 grid steps when the image is
    # large enough so both TensorCores stay busy; no deeper buffering needed.
    def _steps(rt):
        return (n // b_tile) * pl.cdiv(rows, rt)

    while _steps(rows_tile) < 8 and rows_tile > 8:
        rows_tile = max(8, (rows_tile // 2 // 8) * 8)

    return lane_w, hw_pad, rows, rows_tile, b_tile


@functools.partial(jax.jit, static_argnames=("target_tile_bytes",))
def outconv_forward(x_nchw, weight, bias, *, target_tile_bytes=2 << 20):
    """1x1 conv (outconv) forward.

    x_nchw: (N, Cin, H, W)
    weight: (Cout, Cin, 1, 1)   (PyTorch Conv2d weight layout)
    bias:   (Cout,)
    returns (N, Cout, H, W)
    """
    n, cin, h, w = x_nchw.shape
    cout = weight.shape[0]
    hw = h * w

    itemsize = jnp.dtype(x_nchw.dtype).itemsize
    lane_w, hw_pad, rows, rows_tile, b_tile = _plan_tiles(
        n, cin, cout, hw, itemsize, target_tile_bytes)

    x3 = x_nchw.reshape(n, cin, hw)             # pure view: HW is contiguous in NCHW
    if hw_pad != hw:                            # only when H*W isn't a 128-multiple
        x3 = jnp.pad(x3, ((0, 0), (0, 0), (0, hw_pad - hw)))
    x4 = x3.reshape(n, cin, rows, lane_w)       # each channel: full (8,128)-tiled slabs
    w_mat = weight.reshape(cout, cin)           # (Cout, Cin) scalars -> SMEM

    grid = (n // b_tile, pl.cdiv(rows, rows_tile))

    out4 = pl.pallas_call(
        _outconv_kernel,
        out_shape=jax.ShapeDtypeStruct((n, cout, rows, lane_w), x_nchw.dtype),
        grid_spec=pltpu.PrefetchScalarGridSpec(
            num_scalar_prefetch=0,
            grid=grid,
            in_specs=[
                pl.BlockSpec((b_tile, cin, rows_tile, lane_w),
                             lambda b, s: (b, 0, s, 0)),
                pl.BlockSpec(memory_space=pltpu.MemorySpace.SMEM),   # weight scalars
                pl.BlockSpec(memory_space=pltpu.MemorySpace.SMEM),   # bias scalars
            ],
            out_specs=pl.BlockSpec((b_tile, cout, rows_tile, lane_w),
                                   lambda b, s: (b, 0, s, 0)),
        ),
        compiler_params=pltpu.CompilerParams(
            dimension_semantics=("parallel", "parallel"),
        ),
    )(x4, w_mat, bias)

    out3 = out4.reshape(n, cout, hw_pad)[:, :, :hw]
    return out3.reshape(n, cout, h, w)


if __name__ == "__main__":
    # Deterministic synthetic params / inputs (shapes implied by the module).
    N, IN_CH, OUT_CH, H, W = 2, 4, 3, 16, 16

    key = jax.random.PRNGKey(0)
    kx, kw, kb = jax.random.split(key, 3)

    x = jax.random.normal(kx, (N, IN_CH, H, W), dtype=jnp.float32)
    # PyTorch Conv2d default init: uniform in +-1/sqrt(fan_in).
    fan_in = IN_CH * 1 * 1
    bound = 1.0 / (fan_in ** 0.5)
    weight = jax.random.uniform(
        kw, (OUT_CH, IN_CH, 1, 1), minval=-bound, maxval=bound, dtype=jnp.float32
    )
    bias = jax.random.uniform(
        kb, (OUT_CH,), minval=-bound, maxval=bound, dtype=jnp.float32
    )

    y = outconv_forward(x, weight, bias)
    y = jax.block_until_ready(y)

    # Reference check in plain JAX (same math, no Pallas).
    y_ref = (
        jnp.einsum("nihw,oi->nohw", x, weight.reshape(OUT_CH, IN_CH))
        + bias[None, :, None, None]
    )
    assert y.shape == (N, OUT_CH, H, W)
    assert jnp.allclose(y, y_ref, atol=1e-5, rtol=1e-5)

    print("KERNEL_OK")
</pallas_src>

<mosaic_0001>
module attributes {stable_mosaic.version = 11 : i64} {
  func.func @_outconv_kernel(%arg0: i32, %arg1: i32, %arg2: memref<2x4x1x256xf32, #tpu.memory_space<vmem>>, %arg3: memref<3x4xf32, #tpu.memory_space<smem>>, %arg4: memref<3xf32, #tpu.memory_space<smem>>, %arg5: memref<2x3x1x256xf32, #tpu.memory_space<vmem>>) attributes {dimension_semantics = [#tpu.dimension_semantics<parallel>, #tpu.dimension_semantics<parallel>], iteration_bounds = array<i64: 1, 1>, scalar_prefetch = 0 : i64, scratch_operands = 0 : i64, tpu.core_type = #tpu.core_type<tc>, window_params = [{transform_indices = @transform_0, window_bounds = array<i64: 2, 4, 1, 256>}, {transform_indices = @transform_1, window_bounds = array<i64: 3, 4>}, {transform_indices = @transform_2, window_bounds = array<i64: 3>}, {transform_indices = @transform_3, window_bounds = array<i64: 2, 3, 1, 256>}]} {
    %c0 = arith.constant 0 : index
    %c0_0 = arith.constant 0 : index
    %c0_1 = arith.constant 0 : index
    %c0_2 = arith.constant 0 : index
    %0 = vector.load %arg2[%c0, %c0_0, %c0_1, %c0_2] : memref<2x4x1x256xf32, #tpu.memory_space<vmem>>, vector<2x1x1x256xf32>
    %1 = vector.shape_cast %0 : vector<2x1x1x256xf32> to vector<2x1x256xf32>
    %c0_3 = arith.constant 0 : index
    %c0_4 = arith.constant 0 : index
    %2 = memref.load %arg3[%c0_3, %c0_4] : memref<3x4xf32, #tpu.memory_space<smem>>
    %3 = vector.broadcast %2 : f32 to vector<2x1x256xf32>
    %4 = arith.mulf %1, %3 : vector<2x1x256xf32>
    %c0_5 = arith.constant 0 : index
    %c1 = arith.constant 1 : index
    %c0_6 = arith.constant 0 : index
    %c0_7 = arith.constant 0 : index
    %5 = vector.load %arg2[%c0_5, %c1, %c0_6, %c0_7] : memref<2x4x1x256xf32, #tpu.memory_space<vmem>>, vector<2x1x1x256xf32>
    %6 = vector.shape_cast %5 : vector<2x1x1x256xf32> to vector<2x1x256xf32>
    %c0_8 = arith.constant 0 : index
    %c1_9 = arith.constant 1 : index
    %7 = memref.load %arg3[%c0_8, %c1_9] : memref<3x4xf32, #tpu.memory_space<smem>>
    %8 = vector.broadcast %7 : f32 to vector<2x1x256xf32>
    %9 = arith.mulf %6, %8 : vector<2x1x256xf32>
    %10 = arith.addf %4, %9 : vector<2x1x256xf32>
    %c0_10 = arith.constant 0 : index
    %c2 = arith.constant 2 : index
    %c0_11 = arith.constant 0 : index
    %c0_12 = arith.constant 0 : index
    %11 = vector.load %arg2[%c0_10, %c2, %c0_11, %c0_12] : memref<2x4x1x256xf32, #tpu.memory_space<vmem>>, vector<2x1x1x256xf32>
    %12 = vector.shape_cast %11 : vector<2x1x1x256xf32> to vector<2x1x256xf32>
    %c0_13 = arith.constant 0 : index
    %c2_14 = arith.constant 2 : index
    %13 = memref.load %arg3[%c0_13, %c2_14] : memref<3x4xf32, #tpu.memory_space<smem>>
    %14 = vector.broadcast %13 : f32 to vector<2x1x256xf32>
    %15 = arith.mulf %12, %14 : vector<2x1x256xf32>
    %16 = arith.addf %10, %15 : vector<2x1x256xf32>
    %c0_15 = arith.constant 0 : index
    %c3 = arith.constant 3 : index
    %c0_16 = arith.constant 0 : index
    %c0_17 = arith.constant 0 : index
    %17 = vector.load %arg2[%c0_15, %c3, %c0_16, %c0_17] : memref<2x4x1x256xf32, #tpu.memory_space<vmem>>, vector<2x1x1x256xf32>
    %18 = vector.shape_cast %17 : vector<2x1x1x256xf32> to vector<2x1x256xf32>
    %c0_18 = arith.constant 0 : index
    %c3_19 = arith.constant 3 : index
    %19 = memref.load %arg3[%c0_18, %c3_19] : memref<3x4xf32, #tpu.memory_space<smem>>
    %20 = vector.broadcast %19 : f32 to vector<2x1x256xf32>
    %21 = arith.mulf %18, %20 : vector<2x1x256xf32>
    %22 = arith.addf %16, %21 : vector<2x1x256xf32>
    %c0_20 = arith.constant 0 : index
    %23 = memref.load %arg4[%c0_20] : memref<3xf32, #tpu.memory_space<smem>>
    %24 = vector.broadcast %23 : f32 to vector<2x1x256xf32>
    %25 = arith.addf %22, %24 : vector<2x1x256xf32>
    %c0_21 = arith.constant 0 : index
    %c0_22 = arith.constant 0 : index
    %c0_23 = arith.constant 0 : index
    %c0_24 = arith.constant 0 : index
    %26 = vector.load %arg5[%c0_21, %c0_22, %c0_23, %c0_24] : memref<2x3x1x256xf32, #tpu.memory_space<vmem>>, vector<2x1x1x256xf32>
    %27 = vector.shape_cast %26 : vector<2x1x1x256xf32> to vector<2x1x256xf32>
    %28 = vector.shape_cast %25 : vector<2x1x256xf32> to vector<2x1x1x256xf32>
    tpu.vector_store %arg5[%c0_21, %c0_22, %c0_23, %c0_24], %28 {strides = array<i32>} : memref<2x3x1x256xf32, #tpu.memory_space<vmem>>, vector<2x1x1x256xf32>,
    %c0_25 = arith.constant 0 : index
    %c0_26 = arith.constant 0 : index
    %c0_27 = arith.constant 0 : index
    %c0_28 = arith.constant 0 : index
    %29 = vector.load %arg2[%c0_25, %c0_26, %c0_27, %c0_28] : memref<2x4x1x256xf32, #tpu.memory_space<vmem>>, vector<2x1x1x256xf32>
    %30 = vector.shape_cast %29 : vector<2x1x1x256xf32> to vector<2x1x256xf32>
    %c1_29 = arith.constant 1 : index
    %c0_30 = arith.constant 0 : index
    %31 = memref.load %arg3[%c1_29, %c0_30] : memref<3x4xf32, #tpu.memory_space<smem>>
    %32 = vector.broadcast %31 : f32 to vector<2x1x256xf32>
    %33 = arith.mulf %30, %32 : vector<2x1x256xf32>
    %c0_31 = arith.constant 0 : index
    %c1_32 = arith.constant 1 : index
    %c0_33 = arith.constant 0 : index
    %c0_34 = arith.constant 0 : index
    %34 = vector.load %arg2[%c0_31, %c1_32, %c0_33, %c0_34] : memref<2x4x1x256xf32, #tpu.memory_space<vmem>>, vector<2x1x1x256xf32>
    %35 = vector.shape_cast %34 : vector<2x1x1x256xf32> to vector<2x1x256xf32>
    %c1_35 = arith.constant 1 : index
    %c1_36 = arith.constant 1 : index
    %36 = memref.load %arg3[%c1_35, %c1_36] : memref<3x4xf32, #tpu.memory_space<smem>>
    %37 = vector.broadcast %36 : f32 to vector<2x1x256xf32>
    %38 = arith.mulf %35, %37 : vector<2x1x256xf32>
    %39 = arith.addf %33, %38 : vector<2x1x256xf32>
    %c0_37 = arith.constant 0 : index
    %c2_38 = arith.constant 2 : index
    %c0_39 = arith.constant 0 : index
    %c0_40 = arith.constant 0 : index
    %40 = vector.load %arg2[%c0_37, %c2_38, %c0_39, %c0_40] : memref<2x4x1x256xf32, #tpu.memory_space<vmem>>, vector<2x1x1x256xf32>
    %41 = vector.shape_cast %40 : vector<2x1x1x256xf32> to vector<2x1x256xf32>
    %c1_41 = arith.constant 1 : index
    %c2_42 = arith.constant 2 : index
    %42 = memref.load %arg3[%c1_41, %c2_42] : memref<3x4xf32, #tpu.memory_space<smem>>
    %43 = vector.broadcast %42 : f32 to vector<2x1x256xf32>
    %44 = arith.mulf %41, %43 : vector<2x1x256xf32>
    %45 = arith.addf %39, %44 : vector<2x1x256xf32>
    %c0_43 = arith.constant 0 : index
    %c3_44 = arith.constant 3 : index
    %c0_45 = arith.constant 0 : index
    %c0_46 = arith.constant 0 : index
    %46 = vector.load %arg2[%c0_43, %c3_44, %c0_45, %c0_46] : memref<2x4x1x256xf32, #tpu.memory_space<vmem>>, vector<2x1x1x256xf32>
    %47 = vector.shape_cast %46 : vector<2x1x1x256xf32> to vector<2x1x256xf32>
    %c1_47 = arith.constant 1 : index
    %c3_48 = arith.constant 3 : index
    %48 = memref.load %arg3[%c1_47, %c3_48] : memref<3x4xf32, #tpu.memory_space<smem>>
    %49 = vector.broadcast %48 : f32 to vector<2x1x256xf32>
    %50 = arith.mulf %47, %49 : vector<2x1x256xf32>
    %51 = arith.addf %45, %50 : vector<2x1x256xf32>
    %c1_49 = arith.constant 1 : index
    %52 = memref.load %arg4[%c1_49] : memref<3xf32, #tpu.memory_space<smem>>
    %53 = vector.broadcast %52 : f32 to vector<2x1x256xf32>
    %54 = arith.addf %51, %53 : vector<2x1x256xf32>
    %c0_50 = arith.constant 0 : index
    %c1_51 = arith.constant 1 : index
    %c0_52 = arith.constant 0 : index
    %c0_53 = arith.constant 0 : index
    %55 = vector.load %arg5[%c0_50, %c1_51, %c0_52, %c0_53] : memref<2x3x1x256xf32, #tpu.memory_space<vmem>>, vector<2x1x1x256xf32>
    %56 = vector.shape_cast %55 : vector<2x1x1x256xf32> to vector<2x1x256xf32>
    %57 = vector.shape_cast %54 : vector<2x1x256xf32> to vector<2x1x1x256xf32>
    tpu.vector_store %arg5[%c0_50, %c1_51, %c0_52, %c0_53], %57 {strides = array<i32>} : memref<2x3x1x256xf32, #tpu.memory_space<vmem>>, vector<2x1x1x256xf32>,
    %c0_54 = arith.constant 0 : index
    %c0_55 = arith.constant 0 : index
    %c0_56 = arith.constant 0 : index
    %c0_57 = arith.constant 0 : index
    %58 = vector.load %arg2[%c0_54, %c0_55, %c0_56, %c0_57] : memref<2x4x1x256xf32, #tpu.memory_space<vmem>>, vector<2x1x1x256xf32>
    %59 = vector.shape_cast %58 : vector<2x1x1x256xf32> to vector<2x1x256xf32>
    %c2_58 = arith.constant 2 : index
    %c0_59 = arith.constant 0 : index
    %60 = memref.load %arg3[%c2_58, %c0_59] : memref<3x4xf32, #tpu.memory_space<smem>>
    %61 = vector.broadcast %60 : f32 to vector<2x1x256xf32>
    %62 = arith.mulf %59, %61 : vector<2x1x256xf32>
    %c0_60 = arith.constant 0 : index
    %c1_61 = arith.constant 1 : index
    %c0_62 = arith.constant 0 : index
    %c0_63 = arith.constant 0 : index
    %63 = vector.load %arg2[%c0_60, %c1_61, %c0_62, %c0_63] : memref<2x4x1x256xf32, #tpu.memory_space<vmem>>, vector<2x1x1x256xf32>
    %64 = vector.shape_cast %63 : vector<2x1x1x256xf32> to vector<2x1x256xf32>
    %c2_64 = arith.constant 2 : index
    %c1_65 = arith.constant 1 : index
    %65 = memref.load %arg3[%c2_64, %c1_65] : memref<3x4xf32, #tpu.memory_space<smem>>
    %66 = vector.broadcast %65 : f32 to vector<2x1x256xf32>
    %67 = arith.mulf %64, %66 : vector<2x1x256xf32>
    %68 = arith.addf %62, %67 : vector<2x1x256xf32>
    %c0_66 = arith.constant 0 : index
    %c2_67 = arith.constant 2 : index
    %c0_68 = arith.constant 0 : index
    %c0_69 = arith.constant 0 : index
    %69 = vector.load %arg2[%c0_66, %c2_67, %c0_68, %c0_69] : memref<2x4x1x256xf32, #tpu.memory_space<vmem>>, vector<2x1x1x256xf32>
    %70 = vector.shape_cast %69 : vector<2x1x1x256xf32> to vector<2x1x256xf32>
    %c2_70 = arith.constant 2 : index
    %c2_71 = arith.constant 2 : index
    %71 = memref.load %arg3[%c2_70, %c2_71] : memref<3x4xf32, #tpu.memory_space<smem>>
    %72 = vector.broadcast %71 : f32 to vector<2x1x256xf32>
    %73 = arith.mulf %70, %72 : vector<2x1x256xf32>
    %74 = arith.addf %68, %73 : vector<2x1x256xf32>
    %c0_72 = arith.constant 0 : index
    %c3_73 = arith.constant 3 : index
    %c0_74 = arith.constant 0 : index
    %c0_75 = arith.constant 0 : index
    %75 = vector.load %arg2[%c0_72, %c3_73, %c0_74, %c0_75] : memref<2x4x1x256xf32, #tpu.memory_space<vmem>>, vector<2x1x1x256xf32>
    %76 = vector.shape_cast %75 : vector<2x1x1x256xf32> to vector<2x1x256xf32>
    %c2_76 = arith.constant 2 : index
    %c3_77 = arith.constant 3 : index
    %77 = memref.load %arg3[%c2_76, %c3_77] : memref<3x4xf32, #tpu.memory_space<smem>>
    %78 = vector.broadcast %77 : f32 to vector<2x1x256xf32>
    %79 = arith.mulf %76, %78 : vector<2x1x256xf32>
    %80 = arith.addf %74, %79 : vector<2x1x256xf32>
    %c2_78 = arith.constant 2 : index
    %81 = memref.load %arg4[%c2_78] : memref<3xf32, #tpu.memory_space<smem>>
    %82 = vector.broadcast %81 : f32 to vector<2x1x256xf32>
    %83 = arith.addf %80, %82 : vector<2x1x256xf32>
    %c0_79 = arith.constant 0 : index
    %c2_80 = arith.constant 2 : index
    %c0_81 = arith.constant 0 : index
    %c0_82 = arith.constant 0 : index
    %84 = vector.load %arg5[%c0_79, %c2_80, %c0_81, %c0_82] : memref<2x3x1x256xf32, #tpu.memory_space<vmem>>, vector<2x1x1x256xf32>
    %85 = vector.shape_cast %84 : vector<2x1x1x256xf32> to vector<2x1x256xf32>
    %86 = vector.shape_cast %83 : vector<2x1x256xf32> to vector<2x1x1x256xf32>
    tpu.vector_store %arg5[%c0_79, %c2_80, %c0_81, %c0_82], %86 {strides = array<i32>} : memref<2x3x1x256xf32, #tpu.memory_space<vmem>>, vector<2x1x1x256xf32>,
    return
  }
  func.func @transform_0(%arg0: i32, %arg1: i32) -> (i32, i32, i32, i32) {
    %c0_i32 = arith.constant 0 : i32
    %c0_i32_0 = arith.constant 0 : i32
    %c0_i32_1 = arith.constant 0 : i32
    return %arg0, %c0_i32, %arg1, %c0_i32_0 : i32, i32, i32, i32
  }
  func.func @transform_1(%arg0: i32, %arg1: i32) -> (i32, i32) {
    %c0_i32 = arith.constant 0 : i32
    %c0_i32_0 = arith.constant 0 : i32
    %c0_i32_1 = arith.constant 0 : i32
    return %c0_i32, %c0_i32_0 : i32, i32
  }
  func.func @transform_2(%arg0: i32, %arg1: i32) -> i32 {
    %c0_i32 = arith.constant 0 : i32
    %c0_i32_0 = arith.constant 0 : i32
    return %c0_i32 : i32
  }
  func.func @transform_3(%arg0: i32, %arg1: i32) -> (i32, i32, i32, i32) {
    %c0_i32 = arith.constant 0 : i32
    %c0_i32_0 = arith.constant 0 : i32
    %c0_i32_1 = arith.constant 0 : i32
    return %arg0, %c0_i32, %arg1, %c0_i32_0 : i32, i32, i32, i32
  }
}

</mosaic_0001>

<llo_original>
// kernel: outconv_forward.1
$region0: #{outconv_forward.1}
  #allocation0 [shape = 'u32[]', space=smem, size = 0x4, offset = 0x4, fixed_abs, tag = 'smem constant byte address 0x4 - core index']
  #allocation1 [shape = 'u32[144,128]{1,0:T(1,128)}', space=vmem, size = 0x12000, scoped, tag = 'internal scratch']
  %s0 = inlined_call_operand.vmem [shape: f32[2,4,1,256], index: 0, kind: input, shape index: {}]
  %s1 = inlined_call_operand.vmem [shape: f32[3,4], index: 1, kind: input, shape index: {}]
  %s2 = inlined_call_operand.vmem [shape: f32[3], index: 2, kind: input, shape index: {}]
  %s3 = inlined_call_operand.vmem [shape: f32[2,3,1,256], index: 3, kind: output, shape index: {}]
  %s4 = sld [smem:[#allocation0]]
  $region30: #{outconv_forward.1} parent=0
    _
  %s6 = ssub.s32 1, %s4
  %s7 = scalar_select 0, %s6, %s4
  $region1: #{outconv_forward.1} parent=0
    #allocation2 [shape = 'u8[2048]{0}', space=smem, size = 0x800, scoped, tag = 'input window, operand 1, single buffered']
    #allocation3 [shape = 's32[1]{0}', space=sflag, size = 0x4, scoped, tag = 'scoped memory for outconv_forward.1']
    #allocation4 [shape = 'u8[512]{0}', space=smem, size = 0x200, scoped, tag = 'input window, operand 2, single buffered']
    #allocation5 [shape = 's32[1]{0}', space=sflag, size = 0x4, scoped, tag = 'scoped memory for outconv_forward.1']
    %8 = vsyncpa [#allocation3], 0
    %9 = vsyncpa [#allocation5], 0
    // Predicated region
    $region2: #{outconv_forward.1} parent=1 // pred_check
      _
    $region3: #{outconv_forward.1} parent=1 // pred_check_branch
      %11 = sbr.rel (0) target = $region5
    $region4: #{outconv_forward.1} parent=1 // pred_region
      _
    $region5: #{outconv_forward.1} parent=1 // pred_fallthru
      _
    // Predicated region
    $region6: #{outconv_forward.1} parent=1 // pred_check
      _
    $region7: #{outconv_forward.1} parent=1 // pred_check_branch
      %13 = sbr.rel (0) target = $region9
    $region8: #{outconv_forward.1} parent=1 // pred_region
      %s15 = ssub.s32 64, 64
      %16 = vsyncadd [#allocation3], %s15
      %s18 = sshll.u32 %s1, 4
      %s19 = int_to_ptr.vmem [resolvable:$true] %s18
      %21 = dma.vmem_to_smem %s19, 64, [#allocation2], [#allocation3]
    $region9: #{outconv_forward.1} parent=1 // pred_fallthru
      _
    // Predicated region
    $region10: #{outconv_forward.1} parent=1 // pred_check
      _
    $region11: #{outconv_forward.1} parent=1 // pred_check_branch
      %23 = sbr.rel (0) target = $region13
    $region12: #{outconv_forward.1} parent=1 // pred_region
      %s25 = ssub.s32 16, 16
      %26 = vsyncadd [#allocation5], %s25
      %s28 = sshll.u32 %s2, 4
      %s29 = int_to_ptr.vmem [resolvable:$true] %s28
      %31 = dma.vmem_to_smem %s29, 16, [#allocation4], [#allocation5]
    $region13: #{outconv_forward.1} parent=1 // pred_fallthru
      _
    // Predicated region
    $region14: #{outconv_forward.1} parent=1 // pred_check
      _
    $region15: #{outconv_forward.1} parent=1 // pred_check_branch
      %33 = sbr.rel (0) target = $region17
    $region16: #{outconv_forward.1} parent=1 // pred_region
      %34 = dma.done [#allocation3], 64
    $region17: #{outconv_forward.1} parent=1 // pred_fallthru
      _
    // Predicated region
    $region18: #{outconv_forward.1} parent=1 // pred_check
      _
    $region19: #{outconv_forward.1} parent=1 // pred_check_branch
      %36 = sbr.rel (0) target = $region21
    $region20: #{outconv_forward.1} parent=1 // pred_region
      %37 = dma.done [#allocation5], 16
    $region21: #{outconv_forward.1} parent=1 // pred_fallthru
      _
    %38 = sfence
    %v39 = vld [vmem:[%s0] sm:$0x3]
    %v40 = vld [vmem:[%s0 + $0x8] sm:$0x3]
    %s41 = sld [smem:[#allocation2]]
    %v42 = vstv %s41
    %v43 = vmul.f32 %v39, %v42
    %v44 = vmul.f32 %v40, %v42
    %s45 = scalar_lea.vmem %s0, 2
    %v46 = vld [vmem:[%s45] sm:$0x3]
    %v47 = vld [vmem:[%s45 + $0x8] sm:$0x3]
    %s48 = sld [smem:[#allocation2 + $0x1]]
    %v49 = vstv %s48
    %v50 = vmul.f32 %v46, %v49
    %v51 = vmul.f32 %v47, %v49
    %v52 = vadd.f32 %v43, %v50
    %v53 = vadd.f32 %v44, %v51
    %s54 = scalar_lea.vmem %s0, 4
    %v55 = vld [vmem:[%s54] sm:$0x3]
    %v56 = vld [vmem:[%s54 + $0x8] sm:$0x3]
    %s57 = sld [smem:[#allocation2 + $0x2]]
    %v58 = vstv %s57
    %v59 = vmul.f32 %v55, %v58
    %v60 = vmul.f32 %v56, %v58
    %v61 = vadd.f32 %v52, %v59
    %v62 = vadd.f32 %v53, %v60
    %s63 = scalar_lea.vmem %s0, 6
    %v64 = vld [vmem:[%s63] sm:$0x3]
    %v65 = vld [vmem:[%s63 + $0x8] sm:$0x3]
    %s66 = sld [smem:[#allocation2 + $0x3]]
    %v67 = vstv %s66
    %v68 = vmul.f32 %v64, %v67
    %v69 = vmul.f32 %v65, %v67
    %v70 = vadd.f32 %v61, %v68
    %v71 = vadd.f32 %v62, %v69
    %s72 = sld [smem:[#allocation4]]
    %v73 = vstv %s72
    %v74 = vadd.f32 %v70, %v73
    %v75 = vadd.f32 %v71, %v73
    %v76 = vlaneseq
    %vm77 = vcmp.ge.s32.totalorder %v76, 0
    %vm78 = vcmp.lt.s32.totalorder %v76, 256
    %vm79 = vmand %vm77, %vm78
    %80 = vst.msk [vmem:[%s3] sm:$0x3] %vm79, %v74
    %81 = vst.msk [vmem:[%s3 + $0x6] sm:$0x3] %vm79, %v75
    %v82 = vld [vmem:[%s0] sm:$0x3]
    %v83 = vld [vmem:[%s0 + $0x8] sm:$0x3]
    %s84 = sld [smem:[#allocation2 + $0x80]]
    %v85 = vstv %s84
    %v86 = vmul.f32 %v82, %v85
    %v87 = vmul.f32 %v83, %v85
    %v88 = vld [vmem:[%s45] sm:$0x3]
    %v89 = vld [vmem:[%s45 + $0x8] sm:$0x3]
    %s90 = sld [smem:[#allocation2 + $0x81]]
    %v91 = vstv %s90
    %v92 = vmul.f32 %v88, %v91
    %v93 = vmul.f32 %v89, %v91
    %v94 = vadd.f32 %v86, %v92
    %v95 = vadd.f32 %v87, %v93
    %v96 = vld [vmem:[%s54] sm:$0x3]
    %v97 = vld [vmem:[%s54 + $0x8] sm:$0x3]
    %s98 = sld [smem:[#allocation2 + $0x82]]
    %v99 = vstv %s98
    %v100 = vmul.f32 %v96, %v99
    %v101 = vmul.f32 %v97, %v99
    %v102 = vadd.f32 %v94, %v100
    %v103 = vadd.f32 %v95, %v101
    %v104 = vld [vmem:[%s63] sm:$0x3]
    %v105 = vld [vmem:[%s63 + $0x8] sm:$0x3]
    %s106 = sld [smem:[#allocation2 + $0x83]]
    %v107 = vstv %s106
    %v108 = vmul.f32 %v104, %v107
    %v109 = vmul.f32 %v105, %v107
    %v110 = vadd.f32 %v102, %v108
    %v111 = vadd.f32 %v103, %v109
    %s112 = sld [smem:[#allocation4 + $0x1]]
    %v113 = vstv %s112
    %v114 = vadd.f32 %v110, %v113
    %v115 = vadd.f32 %v111, %v113
    %s116 = scalar_lea.vmem %s3, 2
    %117 = vst.msk [vmem:[%s116] sm:$0x3] %vm79, %v114
    %118 = vst.msk [vmem:[%s116 + $0x6] sm:$0x3] %vm79, %v115
    %v119 = vld [vmem:[%s0] sm:$0x3]
    %v120 = vld [vmem:[%s0 + $0x8] sm:$0x3]
    %s121 = sld [smem:[#allocation2 + $0x100]]
    %v122 = vstv %s121
    %v123 = vmul.f32 %v119, %v122
    %v124 = vmul.f32 %v120, %v122
    %v125 = vld [vmem:[%s45] sm:$0x3]
    %v126 = vld [vmem:[%s45 + $0x8] sm:$0x3]
    %s127 = sld [smem:[#allocation2 + $0x101]]
    %v128 = vstv %s127
    %v129 = vmul.f32 %v125, %v128
    %v130 = vmul.f32 %v126, %v128
    %v131 = vadd.f32 %v123, %v129
    %v132 = vadd.f32 %v124, %v130
    %v133 = vld [vmem:[%s54] sm:$0x3]
    %v134 = vld [vmem:[%s54 + $0x8] sm:$0x3]
    %s135 = sld [smem:[#allocation2 + $0x102]]
    %v136 = vstv %s135
    %v137 = vmul.f32 %v133, %v136
    %v138 = vmul.f32 %v134, %v136
    %v139 = vadd.f32 %v131, %v137
    %v140 = vadd.f32 %v132, %v138
    %v141 = vld [vmem:[%s63] sm:$0x3]
    %v142 = vld [vmem:[%s63 + $0x8] sm:$0x3]
    %s143 = sld [smem:[#allocation2 + $0x103]]
    %v144 = vstv %s143
    %v145 = vmul.f32 %v141, %v144
    %v146 = vmul.f32 %v142, %v144
    %v147 = vadd.f32 %v139, %v145
    %v148 = vadd.f32 %v140, %v146
    %s149 = sld [smem:[#allocation4 + $0x2]]
    %v150 = vstv %s149
    %v151 = vadd.f32 %v147, %v150
    %v152 = vadd.f32 %v148, %v150
    %s153 = scalar_lea.vmem %s3, 4
    %154 = vst.msk [vmem:[%s153] sm:$0x3] %vm79, %v151
    %155 = vst.msk [vmem:[%s153 + $0x6] sm:$0x3] %vm79, %v152
    // Predicated region
    $region22: #{outconv_forward.1} parent=1 // pred_check
      _
    $region23: #{outconv_forward.1} parent=1 // pred_check_branch
      %157 = sbr.rel (0) target = $region25
    $region24: #{outconv_forward.1} parent=1 // pred_region
      _
    $region25: #{outconv_forward.1} parent=1 // pred_fallthru
      _
    // Predicated region
    $region26: #{outconv_forward.1} parent=1 // pred_check
      _
    $region27: #{outconv_forward.1} parent=1 // pred_check_branch
      %159 = sbr.rel (0) target = $region29
    $region28: #{outconv_forward.1} parent=1 // pred_region
      _
    $region29: #{outconv_forward.1} parent=1 // pred_fallthru
      _
    %160 = vsyncpa [#allocation3], 1
    %161 = vsyncpa [#allocation5], 1

</llo_original>
